<compile_context>
chip_gen: v7x
topology: tpu7x:2x2x1
jax: 0.10.0
libtpu: 0.0.40
codegen_flags: <defaults>
</compile_context>

<pallas_src>
import functools

import jax
import jax.numpy as jnp
from jax.experimental import pallas as pl
from jax.experimental.pallas import tpu as pltpu


# ------------------------------ Pallas kernel ------------------------------ #

def _blur_kernel(myt_ref, mxt_ref, x_ref, o_ref, *, block, h, w):
    """Separable reflect-padded Gaussian blur: two batched MXU matmuls per tile.

    myt_ref : (H, H)          My^T  (vertical blur operator, pre-transposed)
    mxt_ref : (W, W)          Mx^T  (horizontal blur operator, pre-transposed)
    x_ref   : (block, H, W)   input image block
    o_ref   : (block, H, W)   blurred image block
    """
    mxt = mxt_ref[...]
    myt = myt_ref[...]
    x = x_ref[...]

    # W pass: one big matmul over the whole block.
    t = jnp.dot(x.reshape(block * h, w), mxt,
                preferred_element_type=jnp.float32)            # (block*H, W) f32
    t = t.astype(x_ref.dtype)                                  # bf16 stays bf16 on MXU

    # H pass: swap minor dims (rides the XLU slot), then one big matmul.
    tt = jnp.swapaxes(t.reshape(block, h, w), 1, 2)            # (block, W, H)
    u = jnp.dot(tt.reshape(block * w, h), myt,
                preferred_element_type=jnp.float32)            # (block*W, H) f32
    out = jnp.swapaxes(u.reshape(block, w, h), 1, 2)           # (block, H, W)
    o_ref[...] = out.astype(o_ref.dtype)


# ------------------------- sigma -> blur operators ------------------------- #

def _gaussian_kernel1d(ksize, sigma):
    half = (ksize - 1) * 0.5
    x = jnp.linspace(-half, half, ksize, dtype=jnp.float32)
    pdf = jnp.exp(-0.5 * jnp.square(x / sigma))
    return pdf / jnp.sum(pdf)


def _reflect_blur_matrix(size, kernel1d):
    """Dense (size, size) operator: 1-D Gaussian conv with reflect padding folded in."""
    k = kernel1d.shape[0]
    pad = k // 2
    if pad >= size:
        raise ValueError(
            "reflect padding requires kernel_size // 2 < image dim "
            f"(got pad={pad}, dim={size})")
    pos = jnp.arange(size)[:, None] + jnp.arange(k)[None, :] - pad       # (out, tap)
    pos = jnp.abs(pos)                                                   # reflect left
    pos = jnp.where(pos > size - 1, 2 * (size - 1) - pos, pos)           # reflect right
    rows = jnp.broadcast_to(jnp.arange(size)[:, None], (size, k))
    taps = jnp.broadcast_to(kernel1d[None, :], (size, k))
    # Scatter-add (taps can alias after reflection) -> O(size*k) work, no one-hot.
    return jnp.zeros((size, size), jnp.float32).at[rows, pos].add(taps)  # M[out, in]


# --------------------------- block / VMEM budgeting ------------------------ #

_TARGET_TILE_BYTES = 2 << 20          # ~2 MiB of input per grid step (mem-bound sweet spot)


def _pick_block(nc, img_bytes):
    block = max(1, min(nc, _TARGET_TILE_BYTES // max(img_bytes, 1)))
    if nc >= 2:
        # Keep >= 2 grid steps so megacore "parallel" sharding and the DMA/compute
        # pipeline have work on every TensorCore (v7x) and pipeline stage.
        block = min(block, (nc + 1) // 2)
    return int(block)


# ------------------------------ blur wrapper ------------------------------- #

def gaussian_blur(img, kernel_size, sigma):
    """img: [..., H, W]; kernel_size: (kx, ky); sigma: (sigma_x, sigma_y)."""
    kx, ky = int(kernel_size[0]), int(kernel_size[1])
    sigma_x, sigma_y = sigma
    h, w = img.shape[-2], img.shape[-1]
    lead = img.shape[:-2]

    orig_dtype = img.dtype
    is_float = jnp.issubdtype(orig_dtype, jnp.floating)
    if orig_dtype == jnp.float32 or orig_dtype == jnp.bfloat16:
        compute_dtype = orig_dtype                    # no f32 round-trip over HBM
    else:
        compute_dtype = jnp.float32                   # int / other float -> f32 compute

    # Tiny jnp glue (depends on the traced sigma): 1-D taps + dense blur operators.
    k1x = _gaussian_kernel1d(kx, sigma_x)
    k1y = _gaussian_kernel1d(ky, sigma_y)
    mxt = _reflect_blur_matrix(w, k1x).T.astype(compute_dtype)     # (W_in, W_out)
    myt = _reflect_blur_matrix(h, k1y).T.astype(compute_dtype)     # (H_in, H_out)

    x = img.reshape((-1, h, w))
    if x.dtype != compute_dtype:
        x = x.astype(compute_dtype)
    nc = x.shape[0]

    itemsize = jnp.dtype(compute_dtype).itemsize
    block = _pick_block(nc, h * w * itemsize)
    grid = (nc + block - 1) // block
    padded_nc = grid * block
    if padded_nc != nc:                               # prime / ragged NC: pad, don't shrink
        x = jnp.concatenate(
            [x, jnp.zeros((padded_nc - nc, h, w), compute_dtype)], axis=0)

    tile_bytes = block * h * w * itemsize
    mats_bytes = (h * h + w * w) * itemsize
    # in + out double-buffered tiles, matrices (possibly double-buffered), margin.
    vmem_limit = int(min(max(4 * tile_bytes + 2 * mats_bytes + (4 << 20), 16 << 20),
                         48 << 20))                   # stays under v7x's 64 MiB physical

    cost = pl.CostEstimate(
        flops=2 * padded_nc * h * w * (h + w),
        transcendentals=0,
        bytes_accessed=2 * padded_nc * h * w * itemsize + mats_bytes)

    out = pl.pallas_call(
        functools.partial(_blur_kernel, block=block, h=h, w=w),
        out_shape=jax.ShapeDtypeStruct((padded_nc, h, w), compute_dtype),
        grid=(grid,),
        in_specs=[
            pl.BlockSpec((h, h), lambda i: (0, 0)),            # grid-invariant, VMEM-resident
            pl.BlockSpec((w, w), lambda i: (0, 0)),            # grid-invariant, VMEM-resident
            pl.BlockSpec((block, h, w), lambda i: (i, 0, 0)),
        ],
        out_specs=pl.BlockSpec((block, h, w), lambda i: (i, 0, 0)),
        compiler_params=pltpu.CompilerParams(
            dimension_semantics=("parallel",),                  # shard image blocks over TCs
            vmem_limit_bytes=vmem_limit),
        cost_estimate=cost,
    )(myt, mxt, x)

    out = out[:nc].reshape(lead + (h, w))
    if not is_float:
        out = jnp.round(out).astype(orig_dtype)       # torchvision _cast_squeeze_out
    elif out.dtype != orig_dtype:
        out = out.astype(orig_dtype)
    return out


# ------------------------------ module wrapper ------------------------------ #

def _setup_size(size):
    if isinstance(size, (int, float)):
        return (int(size), int(size))
    size = tuple(int(s) for s in size)
    if len(size) == 1:
        return (size[0], size[0])
    if len(size) != 2:
        raise ValueError("Kernel size should be a tuple/list of two integers")
    return size


class GaussianBlurPallas:
    """Blurs image with a randomly chosen Gaussian blur (torchvision semantics)."""

    def __init__(self, kernel_size, sigma=(0.1, 2.0)):
        self.kernel_size = _setup_size(kernel_size)
        for ks in self.kernel_size:
            if ks <= 0 or ks % 2 == 0:
                raise ValueError("Kernel size value should be an odd and positive number.")
        if isinstance(sigma, (int, float)):
            if sigma <= 0:
                raise ValueError("If sigma is a single number, it must be positive.")
            sigma = (float(sigma), float(sigma))
        else:
            if not 0.0 < sigma[0] <= sigma[1]:
                raise ValueError("sigma values should be positive and of the form (min, max).")
            sigma = (float(sigma[0]), float(sigma[1]))
        self.sigma = sigma

    @staticmethod
    def get_params(key, sigma_min, sigma_max):
        # torch.empty(1).uniform_(min, max) -> deterministic jax.random draw.
        return jax.random.uniform(key, (), jnp.float32, sigma_min, sigma_max)

    def __call__(self, img, key):
        sigma = self.get_params(key, self.sigma[0], self.sigma[1])
        return gaussian_blur(img, self.kernel_size, (sigma, sigma))


# -------------------------- pure-jnp reference check ------------------------ #

def _reference_blur(img, kernel_size, sigma):
    kx, ky = int(kernel_size[0]), int(kernel_size[1])
    k1x = _gaussian_kernel1d(kx, sigma)
    k1y = _gaussian_kernel1d(ky, sigma)
    px, py = kx // 2, ky // 2
    pad = jnp.pad(img, ((0, 0), (0, 0), (py, py), (px, px)), mode="reflect")
    h, w = img.shape[-2], img.shape[-1]
    out = jnp.zeros_like(img)
    for i in range(ky):
        for j in range(kx):
            out = out + k1y[i] * k1x[j] * pad[..., i:i + h, j:j + w]
    return out


# ----------------------------------- main ----------------------------------- #

if __name__ == "__main__":
    key = jax.random.PRNGKey(0)
    k_img, k_sigma = jax.random.split(key)

    # [N, C, H, W] image batch, float, small shapes.
    x = jax.random.normal(k_img, (2, 4, 16, 16), jnp.float32)

    blur = GaussianBlurPallas(kernel_size=5, sigma=(0.1, 2.0))
    y = jax.block_until_ready(blur(x, k_sigma))

    assert y.shape == x.shape and bool(jnp.all(jnp.isfinite(y)))

    # Cross-check the fused Pallas path against a direct reflect-pad conv.
    sigma = GaussianBlurPallas.get_params(k_sigma, 0.1, 2.0)
    ref = _reference_blur(x, blur.kernel_size, sigma)
    assert bool(jnp.allclose(y, ref, atol=1e-5, rtol=1e-5))

    print("KERNEL_OK")
</pallas_src>

<mosaic_0001>
module attributes {stable_mosaic.version = 11 : i64} {
  func.func @_blur_kernel(%arg0: i32, %arg1: memref<16x16xf32, #tpu.memory_space<vmem>>, %arg2: memref<16x16xf32, #tpu.memory_space<vmem>>, %arg3: memref<4x16x16xf32, #tpu.memory_space<vmem>>, %arg4: memref<4x16x16xf32, #tpu.memory_space<vmem>>) attributes {dimension_semantics = [#tpu.dimension_semantics<parallel>], iteration_bounds = array<i64: 2>, scalar_prefetch = 0 : i64, scratch_operands = 0 : i64, tpu.core_type = #tpu.core_type<tc>, window_params = [{pipeline_mode = #tpu.pipeline_mode<synchronous>, transform_indices = @transform_0, window_bounds = array<i64: 16, 16>}, {pipeline_mode = #tpu.pipeline_mode<synchronous>, transform_indices = @transform_1, window_bounds = array<i64: 16, 16>}, {transform_indices = @transform_2, window_bounds = array<i64: 4, 16, 16>}, {transform_indices = @transform_3, window_bounds = array<i64: 4, 16, 16>}]} {
    %c0 = arith.constant 0 : index
    %c0_0 = arith.constant 0 : index
    %0 = vector.load %arg2[%c0, %c0_0] : memref<16x16xf32, #tpu.memory_space<vmem>>, vector<16x16xf32>
    %c0_1 = arith.constant 0 : index
    %c0_2 = arith.constant 0 : index
    %1 = vector.load %arg1[%c0_1, %c0_2] : memref<16x16xf32, #tpu.memory_space<vmem>>, vector<16x16xf32>
    %c0_3 = arith.constant 0 : index
    %c0_4 = arith.constant 0 : index
    %c0_5 = arith.constant 0 : index
    %2 = vector.load %arg3[%c0_3, %c0_4, %c0_5] : memref<4x16x16xf32, #tpu.memory_space<vmem>>, vector<4x16x16xf32>
    %3 = vector.shape_cast %2 : vector<4x16x16xf32> to vector<64x16xf32>
    %cst = arith.constant dense<0.000000e+00> : vector<64x16xf32>
    %4 = tpu.matmul %3, %0, %cst {dimension_numbers = #tpu.dot_dimension_numbers<[1], [0], [0], [1], [0, 0, 1, 1], [], []>} : vector<64x16xf32>, vector<16x16xf32>, vector<64x16xf32> -> vector<64x16xf32>
    %5 = vector.shape_cast %4 : vector<64x16xf32> to vector<4x16x16xf32>
    %6 = tpu.transpose %5, [0, 2, 1] : vector<4x16x16xf32> -> vector<4x16x16xf32>
    %7 = vector.shape_cast %6 : vector<4x16x16xf32> to vector<64x16xf32>
    %cst_6 = arith.constant dense<0.000000e+00> : vector<64x16xf32>
    %8 = tpu.matmul %7, %1, %cst_6 {dimension_numbers = #tpu.dot_dimension_numbers<[1], [0], [0], [1], [0, 0, 1, 1], [], []>} : vector<64x16xf32>, vector<16x16xf32>, vector<64x16xf32> -> vector<64x16xf32>
    %9 = vector.shape_cast %8 : vector<64x16xf32> to vector<4x16x16xf32>
    %10 = tpu.transpose %9, [0, 2, 1] : vector<4x16x16xf32> -> vector<4x16x16xf32>
    %c0_7 = arith.constant 0 : index
    %c0_8 = arith.constant 0 : index
    %c0_9 = arith.constant 0 : index
    %11 = vector.load %arg4[%c0_7, %c0_8, %c0_9] : memref<4x16x16xf32, #tpu.memory_space<vmem>>, vector<4x16x16xf32>
    tpu.vector_store %arg4[%c0_7, %c0_8, %c0_9], %10 {strides = array<i32>} : memref<4x16x16xf32, #tpu.memory_space<vmem>>, vector<4x16x16xf32>,
    return
  }
  func.func @transform_0(%arg0: i32) -> (i32, i32) {
    %c0_i32 = arith.constant 0 : i32
    %c0_i32_0 = arith.constant 0 : i32
    %c0_i32_1 = arith.constant 0 : i32
    return %c0_i32, %c0_i32_0 : i32, i32
  }
  func.func @transform_1(%arg0: i32) -> (i32, i32) {
    %c0_i32 = arith.constant 0 : i32
    %c0_i32_0 = arith.constant 0 : i32
    %c0_i32_1 = arith.constant 0 : i32
    return %c0_i32, %c0_i32_0 : i32, i32
  }
  func.func @transform_2(%arg0: i32) -> (i32, i32, i32) {
    %c0_i32 = arith.constant 0 : i32
    %c0_i32_0 = arith.constant 0 : i32
    %c0_i32_1 = arith.constant 0 : i32
    return %arg0, %c0_i32, %c0_i32_0 : i32, i32, i32
  }
  func.func @transform_3(%arg0: i32) -> (i32, i32, i32) {
    %c0_i32 = arith.constant 0 : i32
    %c0_i32_0 = arith.constant 0 : i32
    %c0_i32_1 = arith.constant 0 : i32
    return %arg0, %c0_i32, %c0_i32_0 : i32, i32, i32
  }
}

</mosaic_0001>

<llo_original>
// kernel: tpu_custom_call.1
$region0: #{tpu_custom_call.1}
  #allocation0 [shape = 'u32[]', space=smem, size = 0x4, offset = 0x4, fixed_abs, tag = 'smem constant byte address 0x4 - core index']
  #allocation1 [shape = 'u32[144,128]{1,0:T(1,128)}', space=vmem, size = 0x12000, scoped, tag = 'internal scratch']
  %s0 = inlined_call_operand.hbm [shape: f32[16,16], index: 0, kind: input, shape index: {}]
  %s1 = inlined_call_operand.hbm [shape: f32[16,16], index: 1, kind: input, shape index: {}]
  %s2 = inlined_call_operand.hbm [shape: f32[8,16,16], index: 2, kind: input, shape index: {}]
  %s3 = inlined_call_operand.hbm [shape: f32[8,16,16], index: 3, kind: output, shape index: {}]
  %s4 = sld [smem:[#allocation0]]
  $region57: #{tpu_custom_call.1} parent=0
    _
  %s6 = ssub.s32 1, %s4
  %s7 = scalar_select 0, %s6, %s4
  $region1: #{tpu_custom_call.1} parent=0
    #allocation2 [shape = 'u8[8192]{0}', space=vmem, size = 0x2000, scoped, tag = 'input window, operand 0, single buffered']
    #allocation3 [shape = 's32[2]{0}', space=sflag, size = 0x8, scoped, tag = 'scoped memory for tpu_custom_call.1']
    #allocation4 [shape = 's32[2]{0}', space=sflag, size = 0x8, scoped, tag = 'scoped memory for tpu_custom_call.1']
    #allocation5 [shape = 'u8[8192]{0}', space=vmem, size = 0x2000, scoped, tag = 'input window, operand 1, single buffered']
    #allocation6 [shape = 's32[1]{0}', space=sflag, size = 0x4, scoped, tag = 'scoped memory for tpu_custom_call.1']
    #allocation7 [shape = 'u8[65536]{0}', space=vmem, size = 0x10000, scoped, tag = 'input window, operand 2']
    #allocation8 [shape = 'u8[65536]{0}', space=vmem, size = 0x10000, scoped, tag = 'output window, operand 0']
    %8 = vsyncpa [#allocation3], 0
    %9 = vsyncpa [#allocation6], 0
    %10 = vsyncpa [#allocation4], 0
    %s11 = scalar_lea.sflag [#allocation4], 1
    %12 = vsyncpa %s11, 0
    loop: start=0, step=1, limit=4
    $region2: #{tpu_custom_call.1} parent=1 // loop_pre_header
      _
    $region3: #{tpu_custom_call.1} parent=1 // loop_header
      %s14 = sphi 0, %s18
      %p15 = scmp.ge.s32.totalorder %s14, 4
      %s22 = sphi 0, %s22
      %s24 = sphi 0, %s22
      %s25 = sphi 0, %s24
      %s39 = sphi 0, %s25
      %s43 = sphi 0, %s43
      %s45 = sphi 0, %s43
      %s46 = sphi 0, %s45
      %s60 = sphi 0, %s46
      %s66 = sphi 0, %s68
      %s69 = sphi 0, %s66
      %s70 = sphi 0, %s69
      %s86 = sphi 0, %s70
      %s92 = sphi 0, %s94
      %s95 = sphi 0, %s92
      %s96 = sphi 0, %s95
      %s112 = sphi 0, %s96
    $region4: #{tpu_custom_call.1} parent=1 // loop_header_branch
      %17 = sbr.rel (%p15) target = $region8
    $region5: #{tpu_custom_call.1} parent=1 // loop_body
      %s19 = ssub.s32 %s14, 1
      %s20 = ssub.s32 %s14, 2
      %s21 = sadd.s32 %s14, 1
      %s23 = sadd.s32 %s22, 1
      %p26 = scmp.eq.s32.totalorder %s14, 1
      %p27 = scmp.ne.s32.totalorder %s22, %s24
      %p28 = scmp.eq.s32.totalorder %s14, 0
      %p29 = por %p27, %p28
      %p30 = scmp.ne.s32.totalorder %s22, %s24
      %p31 = scmp.eq.s32.totalorder %s19, 1
      %p32 = por %p30, %p31
      %p33 = scmp.ne.s32.totalorder %s24, %s25
      %p34 = scmp.eq.s32.totalorder %s19, 0
      %p35 = por %p33, %p34
      %p36 = scmp.ne.s32.totalorder %s24, %s25
      %p37 = scmp.eq.s32.totalorder %s20, 1
      %p38 = por %p36, %p37
      %p40 = scmp.ne.s32.totalorder %s25, %s39
      %p41 = scmp.eq.s32.totalorder %s20, 0
      %p42 = por %p40, %p41
      %s44 = sadd.s32 %s43, 1
      %p47 = scmp.eq.s32.totalorder %s14, 1
      %p48 = scmp.ne.s32.totalorder %s43, %s45
      %p49 = scmp.eq.s32.totalorder %s14, 0
      %p50 = por %p48, %p49
      %p51 = scmp.ne.s32.totalorder %s43, %s45
      %p52 = scmp.eq.s32.totalorder %s19, 1
      %p53 = por %p51, %p52
      %p54 = scmp.ne.s32.totalorder %s45, %s46
      %p55 = scmp.eq.s32.totalorder %s19, 0
      %p56 = por %p54, %p55
      %p57 = scmp.ne.s32.totalorder %s45, %s46
      %p58 = scmp.eq.s32.totalorder %s20, 1
      %p59 = por %p57, %p58
      %p61 = scmp.ne.s32.totalorder %s46, %s60
      %p62 = scmp.eq.s32.totalorder %s20, 0
      %p63 = por %p61, %p62
      %s64 = ssub.s32 %s14, %s21
      %p65 = scmp.eq.s32.totalorder %s64, 0
      %s67 = sadd.s32 %s66, 1
      %s68 = scalar_select %p65, %s66, %s67
      %p71 = pneg %p65
      %p72 = scmp.eq.s32.totalorder %s14, 1
      %p73 = por %p71, %p72
      %p74 = scmp.ne.s32.totalorder %s66, %s69
      %p75 = scmp.eq.s32.totalorder %s14, 0
      %p76 = por %p74, %p75
      %p77 = scmp.ne.s32.totalorder %s66, %s69
      %p78 = scmp.eq.s32.totalorder %s19, 1
      %p79 = por %p77, %p78
      %p80 = scmp.ne.s32.totalorder %s69, %s70
      %p81 = scmp.eq.s32.totalorder %s19, 0
      %p82 = por %p80, %p81
      %p83 = scmp.ne.s32.totalorder %s69, %s70
      %p84 = scmp.eq.s32.totalorder %s20, 1
      %p85 = por %p83, %p84
      %p87 = scmp.ne.s32.totalorder %s70, %s86
      %p88 = scmp.eq.s32.totalorder %s20, 0
      %p89 = por %p87, %p88
      %s90 = ssub.s32 %s14, %s21
      %p91 = scmp.eq.s32.totalorder %s90, 0
      %s93 = sadd.s32 %s92, 1
      %s94 = scalar_select %p91, %s92, %s93
      %p97 = pneg %p91
      %p98 = scmp.eq.s32.totalorder %s14, 1
      %p99 = por %p97, %p98
      %p100 = scmp.ne.s32.totalorder %s92, %s95
      %p101 = scmp.eq.s32.totalorder %s14, 0
      %p102 = por %p100, %p101
      %p103 = scmp.ne.s32.totalorder %s92, %s95
      %p104 = scmp.eq.s32.totalorder %s19, 1
      %p105 = por %p103, %p104
      %p106 = scmp.ne.s32.totalorder %s95, %s96
      %p107 = scmp.eq.s32.totalorder %s19, 0
      %p108 = por %p106, %p107
      %p109 = scmp.ne.s32.totalorder %s95, %s96
      %p110 = scmp.eq.s32.totalorder %s20, 1
      %p111 = por %p109, %p110
      %p113 = scmp.ne.s32.totalorder %s96, %s112
      %p114 = scmp.eq.s32.totalorder %s20, 0
      %p115 = por %p113, %p114
      %p116 = scmp.le.s32.totalorder 1, %s14
      %p117 = scmp.lt.s32.totalorder %s14, 3
      %p118 = pnand %p116, %p117
      %p119 = pneg %p118
      // Predicated region
      $region9: #{tpu_custom_call.1} parent=5 // pred_check
        _
      $region10: #{tpu_custom_call.1} parent=5 // pred_check_branch
        %121 = sbr.rel (%p118) target = $region12
      $region11: #{tpu_custom_call.1} parent=5 // pred_region
        %s122 = ssub.s32 %s14, 1
        // Predicated region
        $region13: #{tpu_custom_call.1} parent=11 // pred_check
          %p123 = pneg %p35
        $region14: #{tpu_custom_call.1} parent=11 // pred_check_branch
          %125 = sbr.rel (%p123) target = $region16
        $region15: #{tpu_custom_call.1} parent=11 // pred_region
          %s127 = ssub.s32 256, 256
          %128 = vsyncadd [#allocation3], %s127
          %s129 = sshll.u32 [#allocation2], 4
          %s130 = int_to_ptr.vmem [resolvable:$true] %s129
          %135 = dma.hbm_to_vmem [thread:$0]  %s0, 256, %s130, [#allocation3], 128, 128, 8
        $region16: #{tpu_custom_call.1} parent=11 // pred_fallthru
          _
        // Predicated region
        $region17: #{tpu_custom_call.1} parent=11 // pred_check
          %p136 = pneg %p56
        $region18: #{tpu_custom_call.1} parent=11 // pred_check_branch
          %138 = sbr.rel (%p136) target = $region20
        $region19: #{tpu_custom_call.1} parent=11 // pred_region
          %s140 = ssub.s32 256, 256
          %141 = vsyncadd [#allocation6], %s140
          %s142 = sshll.u32 [#allocation5], 4
          %s143 = int_to_ptr.vmem [resolvable:$true] %s142
          %148 = dma.hbm_to_vmem [thread:$0]  %s1, 256, %s143, [#allocation6], 128, 128, 8
        $region20: #{tpu_custom_call.1} parent=11 // pred_fallthru
          _
      $region12: #{tpu_custom_call.1} parent=5 // pred_fallthru
        _
      %p149 = scmp.lt.s32.totalorder %s14, 2
      // Predicated region
      $region21: #{tpu_custom_call.1} parent=5 // pred_check
        %p150 = pneg %p149
      $region22: #{tpu_custom_call.1} parent=5 // pred_check_branch
        %152 = sbr.rel (%p150) target = $region24
      $region23: #{tpu_custom_call.1} parent=5 // pred_region
        // Predicated region
        $region25: #{tpu_custom_call.1} parent=23 // pred_check
          %p153 = pneg %p76
        $region26: #{tpu_custom_call.1} parent=23 // pred_check_branch
          %155 = sbr.rel (%p153) target = $region28
        $region27: #{tpu_custom_call.1} parent=23 // pred_region
          %s156 = sand.u32 %s14, 1
          %s157 = scalar_lea.sflag [#allocation3], %s156
          %s158 = sand.u32 %s66, 1
          %s159 = smul.addr %s158, 64
          %s160 = scalar_lea.vmem [#allocation7], %s159
          %s161 = smul.u32 4, %s14
          %s163 = ssub.s32 1024, 1024
          %164 = vsyncadd %s157, %s163
          %s165 = smul.addr %s161, 2
          %s166 = smul.addr %s165, 128
          %s167 = scalar_lea.hbm %s2, %s166
          %s168 = sshll.u32 %s160, 4
          %s169 = int_to_ptr.vmem [resolvable:$true] %s168
          %174 = dma.hbm_to_vmem [thread:$0]  %s167, 1024, %s169, %s157, 128, 128, 8
        $region28: #{tpu_custom_call.1} parent=23 // pred_fallthru
          _
      $region24: #{tpu_custom_call.1} parent=5 // pred_fallthru
        _
      %p175 = scmp.le.s32.totalorder 1, %s14
      %p176 = scmp.lt.s32.totalorder %s14, 3
      %p177 = pnand %p175, %p176
      %p178 = pneg %p177
      // Predicated region
      $region29: #{tpu_custom_call.1} parent=5 // pred_check
        _
      $region30: #{tpu_custom_call.1} parent=5 // pred_check_branch
        %180 = sbr.rel (%p177) target = $region32
      $region31: #{tpu_custom_call.1} parent=5 // pred_region
        %s181 = ssub.s32 %s14, 1
        // Predicated region
        $region33: #{tpu_custom_call.1} parent=31 // pred_check
          %p182 = pneg %p35
        $region34: #{tpu_custom_call.1} parent=31 // pred_check_branch
          %184 = sbr.rel (%p182) target = $region36
        $region35: #{tpu_custom_call.1} parent=31 // pred_region
          %185 = dma.done [#allocation3], 256
        $region36: #{tpu_custom_call.1} parent=31 // pred_fallthru
          _
        // Predicated region
        $region37: #{tpu_custom_call.1} parent=31 // pred_check
          %p186 = pneg %p56
        $region38: #{tpu_custom_call.1} parent=31 // pred_check_branch
          %188 = sbr.rel (%p186) target = $region40
        $region39: #{tpu_custom_call.1} parent=31 // pred_region
          %189 = dma.done [#allocation6], 256
        $region40: #{tpu_custom_call.1} parent=31 // pred_fallthru
          _
        %s190 = sand.u32 %s19, 1
        %s191 = scalar_lea.sflag [#allocation3], %s190
        %s192 = sand.u32 %s69, 1
        %s193 = smul.addr %s192, 64
        %s194 = scalar_lea.vmem [#allocation7], %s193
        // Predicated region
        $region41: #{tpu_custom_call.1} parent=31 // pred_check
          %p195 = pneg %p82
        $region42: #{tpu_custom_call.1} parent=31 // pred_check_branch
          %197 = sbr.rel (%p195) target = $region44
        $region43: #{tpu_custom_call.1} parent=31 // pred_region
          %198 = dma.done %s191, 1024
        $region44: #{tpu_custom_call.1} parent=31 // pred_fallthru
          _
        %p199 = pneg %p35
        %p200 = pneg %p32
        %p201 = pneg %p56
        %p202 = pneg %p53
        %s203 = sand.u32 %s19, 1
        %s204 = scalar_lea.sflag [#allocation3], %s203
        %s205 = sand.u32 %s69, 1
        %s206 = smul.addr %s205, 64
        %s207 = scalar_lea.vmem [#allocation7], %s206
        %p208 = pneg %p82
        %p209 = pneg %p79
        %p210 = pneg %p108
        %p211 = pneg %p105
        %s212 = sand.u32 %s95, 1
        %s213 = scalar_lea.sflag [#allocation4], %s212
        %s214 = sand.u32 %s95, 1
        %s215 = smul.addr %s214, 64
        %s216 = scalar_lea.vmem [#allocation8], %s215
        %s217 = smul.u32 4, %s19
        %s218 = smul.u32 4, %s19
        %v219 = vld [vmem:[#allocation5] sm:$0xff]
        %v220 = vld [vmem:[#allocation5 + $0x8] sm:$0xff]
        %v221 = vld [vmem:[#allocation2] sm:$0xff]
        %v222 = vld [vmem:[#allocation2 + $0x8] sm:$0xff]
        %v223 = vld [vmem:[%s194] sm:$0xff]
        %v224 = vld [vmem:[%s194 + $0x8] sm:$0xff]
        %v225 = vld [vmem:[%s194 + $0x10] sm:$0xff]
        %v226 = vld [vmem:[%s194 + $0x18] sm:$0xff]
        %v227 = vld [vmem:[%s194 + $0x20] sm:$0xff]
        %v228 = vld [vmem:[%s194 + $0x28] sm:$0xff]
        %v229 = vld [vmem:[%s194 + $0x30] sm:$0xff]
        %v230 = vld [vmem:[%s194 + $0x38] sm:$0xff]
        %vm231 = vcmask 130048
        %v233 = vsel %vm231, %v223, 0
        %v236 = vsel %vm231, %v224, 0
        %v239 = vsel %vm231, %v225, 0
        %v242 = vsel %vm231, %v226, 0
        %v245 = vsel %vm231, %v227, 0
        %v248 = vsel %vm231, %v228, 0
        %v251 = vsel %vm231, %v229, 0
        %v254 = vsel %vm231, %v230, 0
        %256 = vmatprep.subr.mxu0 0.0
        %257 = vmatpush1.msra.mxu0 %v219
        %258 = vmatprep.subr.mxu0 0.0
        %259 = vmatpush1.msra.mxu0 %v220
        %260 = vmatprep.subr.mxu0 0.0
        %261 = vmatpush1.msra.mxu0 0.0
        %262 = vmatprep.subr.mxu0 0.0
        %263 = vmatpush1.msra.mxu0 0.0
        %264 = vmatprep.subr.mxu0 0.0
        %265 = vmatpush1.msra.mxu0 0.0
        %266 = vmatprep.subr.mxu0 0.0
        %267 = vmatpush1.msra.mxu0 0.0
        %268 = vmatprep.subr.mxu0 0.0
        %269 = vmatpush1.msra.mxu0 0.0
        %270 = vmatprep.subr.mxu0 0.0
        %271 = vmatpush1.msra.mxu0 0.0
        %272 = vmatprep.subr.mxu0 0.0
        %273 = vmatpush1.msra.mxu0 0.0
        %274 = vmatprep.subr.mxu0 0.0
        %275 = vmatpush1.msra.mxu0 0.0
        %276 = vmatprep.subr.mxu0 0.0
        %277 = vmatpush1.msra.mxu0 0.0
        %278 = vmatprep.subr.mxu0 0.0
        %279 = vmatpush1.msra.mxu0 0.0
        %280 = vmatprep.subr.mxu0 0.0
        %281 = vmatpush1.msra.mxu0 0.0
        %282 = vmatprep.subr.mxu0 0.0
        %283 = vmatpush1.msra.mxu0 0.0
        %284 = vmatprep.subr.mxu0 0.0
        %285 = vmatpush1.msra.mxu0 0.0
        %286 = vmatprep.subr.mxu0 0.0
        %287 = vmatpush1.msra.mxu0 0.0
        %288 = vmatprep.subr.mxu0 0.0
        %289 = vmatpush1.msra.mxu0 0.0
        %290 = vmatprep.subr.mxu0 0.0
        %291 = vmatpush1.msra.mxu0 0.0
        %292 = vmatprep.subr.mxu0 0.0
        %293 = vmatpush1.msra.mxu0 0.0
        %294 = vmatprep.subr.mxu0 0.0
        %295 = vmatpush1.msra.mxu0 0.0
        %296 = vmatprep.subr.mxu0 0.0
        %297 = vmatpush1.msra.mxu0 0.0
        %298 = vmatprep.subr.mxu0 0.0
        %299 = vmatpush1.msra.mxu0 0.0
        %300 = vmatprep.subr.mxu0 0.0
        %301 = vmatpush1.msra.mxu0 0.0
        %302 = vmatprep.subr.mxu0 0.0
        %303 = vmatpush1.msra.mxu0 0.0
        %304 = vmatprep.subr.mxu0 0.0
        %305 = vmatpush1.msra.mxu0 0.0
        %306 = vmatprep.subr.mxu0 0.0
        %307 = vmatpush1.msra.mxu0 0.0
        %308 = vmatprep.subr.mxu0 0.0
        %309 = vmatpush1.msra.mxu0 0.0
        %310 = vmatprep.subr.mxu0 0.0
        %311 = vmatpush1.msra.mxu0 0.0
        %312 = vmatprep.subr.mxu0 0.0
        %313 = vmatpush1.msra.mxu0 0.0
        %314 = vmatprep.subr.mxu0 0.0
        %315 = vmatpush1.msra.mxu0 0.0
        %316 = vmatprep.subr.mxu0 0.0
        %317 = vmatpush1.msra.mxu0 0.0
        %318 = vmatprep.subr.mxu0 0.0
        %319 = vmatpush1.msra.mxu0 0.0
        %320 = vmatprep.mubr.f32.mxu0 0.0
        %321 = vmatmul.mubr.f32.gmra.mrb[0].mxu0 %v233
        %v322 = vpop.f32.mrb[0].mxu0
        %v323 = vadd.f32 0.0, %v322
        %v324 = vpop.f32.mrb[0].mxu0
        %325 = vmatprep.mubr.f32.mxu0 0.0
        %326 = vmatmul.mubr.f32.gmra.mrb[0].mxu0 %v236
        %v327 = vpop.f32.mrb[0].mxu0
        %v328 = vadd.f32 0.0, %v327
        %v329 = vpop.f32.mrb[0].mxu0
        %330 = vmatprep.mubr.f32.mxu0 0.0
        %331 = vmatmul.mubr.f32.gmra.mrb[0].mxu0 %v239
        %v332 = vpop.f32.mrb[0].mxu0
        %v333 = vadd.f32 0.0, %v332
        %v334 = vpop.f32.mrb[0].mxu0
        %335 = vmatprep.mubr.f32.mxu0 0.0
        %336 = vmatmul.mubr.f32.gmra.mrb[0].mxu0 %v242
        %v337 = vpop.f32.mrb[0].mxu0
        %v338 = vadd.f32 0.0, %v337
        %v339 = vpop.f32.mrb[0].mxu0
        %340 = vmatprep.mubr.f32.mxu0 0.0
        %341 = vmatmul.mubr.f32.gmra.mrb[0].mxu0 %v245
        %v342 = vpop.f32.mrb[0].mxu0
        %v343 = vadd.f32 0.0, %v342
        %v344 = vpop.f32.mrb[0].mxu0
        %345 = vmatprep.mubr.f32.mxu0 0.0
        %346 = vmatmul.mubr.f32.gmra.mrb[0].mxu0 %v248
        %v347 = vpop.f32.mrb[0].mxu0
        %v348 = vadd.f32 0.0, %v347
        %v349 = vpop.f32.mrb[0].mxu0
        %350 = vmatprep.mubr.f32.mxu0 0.0
        %351 = vmatmul.mubr.f32.gmra.mrb[0].mxu0 %v251
        %v352 = vpop.f32.mrb[0].mxu0
        %v353 = vadd.f32 0.0, %v352
        %v354 = vpop.f32.mrb[0].mxu0
        %355 = vmatprep.mubr.f32.mxu0 0.0
        %356 = vmatmul.mubr.f32.gmra.mrb[0].mxu0 %v254
        %v357 = vpop.f32.mrb[0].mxu0
        %v358 = vadd.f32 0.0, %v357
        %v359 = vpop.f32.mrb[0].mxu0
        %360 = vdwg.mxu0
        %361 = vxpose.xlu0.b32.start [1/16] %v323, 128
        %362 = vxpose.xlu0.b32.cont [2/16] %v328, 128
        %363 = vxpose.xlu0.b32.cont [3/16] 0.0, 128
        %364 = vxpose.xlu0.b32.cont [4/16] 0.0, 128
        %365 = vxpose.xlu0.b32.cont [5/16] 0.0, 128
        %366 = vxpose.xlu0.b32.cont [6/16] 0.0, 128
        %367 = vxpose.xlu0.b32.cont [7/16] 0.0, 128
        %368 = vxpose.xlu0.b32.cont [8/16] 0.0, 128
        %369 = vxpose.xlu0.b32.cont [9/16] 0.0, 128
        %370 = vxpose.xlu0.b32.cont [10/16] 0.0, 128
        %371 = vxpose.xlu0.b32.cont [11/16] 0.0, 128
        %372 = vxpose.xlu0.b32.cont [12/16] 0.0, 128
        %373 = vxpose.xlu0.b32.cont [13/16] 0.0, 128
        %374 = vxpose.xlu0.b32.cont [14/16] 0.0, 128
        %375 = vxpose.xlu0.b32.cont [15/16] 0.0, 128
        %376 = vxpose.xlu0.b32.end [16/16] 0.0, 128
        %v377 = vpop.trf.xlu0
        %v378 = vpop.trf.xlu0
        %v379 = vpop.trf.xlu0
        %v380 = vpop.trf.xlu0
        %v381 = vpop.trf.xlu0
        %v382 = vpop.trf.xlu0
        %v383 = vpop.trf.xlu0
        %v384 = vpop.trf.xlu0
        %v385 = vpop.trf.xlu0
        %v386 = vpop.trf.xlu0
        %v387 = vpop.trf.xlu0
        %v388 = vpop.trf.xlu0
        %v389 = vpop.trf.xlu0
        %v390 = vpop.trf.xlu0
        %v391 = vpop.trf.xlu0
        %v392 = vpop.trf.xlu0
        %393 = vxpose.xlu0.b32.start [1/16] %v333, 128
        %394 = vxpose.xlu0.b32.cont [2/16] %v338, 128
        %395 = vxpose.xlu0.b32.cont [3/16] 0.0, 128
        %396 = vxpose.xlu0.b32.cont [4/16] 0.0, 128
        %397 = vxpose.xlu0.b32.cont [5/16] 0.0, 128
        %398 = vxpose.xlu0.b32.cont [6/16] 0.0, 128
        %399 = vxpose.xlu0.b32.cont [7/16] 0.0, 128
        %400 = vxpose.xlu0.b32.cont [8/16] 0.0, 128
        %401 = vxpose.xlu0.b32.cont [9/16] 0.0, 128
        %402 = vxpose.xlu0.b32.cont [10/16] 0.0, 128
        %403 = vxpose.xlu0.b32.cont [11/16] 0.0, 128
        %404 = vxpose.xlu0.b32.cont [12/16] 0.0, 128
        %405 = vxpose.xlu0.b32.cont [13/16] 0.0, 128
        %406 = vxpose.xlu0.b32.cont [14/16] 0.0, 128
        %407 = vxpose.xlu0.b32.cont [15/16] 0.0, 128
        %408 = vxpose.xlu0.b32.end [16/16] 0.0, 128
        %v409 = vpop.trf.xlu0
        %v410 = vpop.trf.xlu0
        %v411 = vpop.trf.xlu0
        %v412 = vpop.trf.xlu0
        %v413 = vpop.trf.xlu0
        %v414 = vpop.trf.xlu0
        %v415 = vpop.trf.xlu0
        %v416 = vpop.trf.xlu0
        %v417 = vpop.trf.xlu0
        %v418 = vpop.trf.xlu0
        %v419 = vpop.trf.xlu0
        %v420 = vpop.trf.xlu0
        %v421 = vpop.trf.xlu0
        %v422 = vpop.trf.xlu0
        %v423 = vpop.trf.xlu0
        %v424 = vpop.trf.xlu0
        %425 = vxpose.xlu0.b32.start [1/16] %v343, 128
        %426 = vxpose.xlu0.b32.cont [2/16] %v348, 128
        %427 = vxpose.xlu0.b32.cont [3/16] 0.0, 128
        %428 = vxpose.xlu0.b32.cont [4/16] 0.0, 128
        %429 = vxpose.xlu0.b32.cont [5/16] 0.0, 128
        %430 = vxpose.xlu0.b32.cont [6/16] 0.0, 128
        %431 = vxpose.xlu0.b32.cont [7/16] 0.0, 128
        %432 = vxpose.xlu0.b32.cont [8/16] 0.0, 128
        %433 = vxpose.xlu0.b32.cont [9/16] 0.0, 128
        %434 = vxpose.xlu0.b32.cont [10/16] 0.0, 128
        %435 = vxpose.xlu0.b32.cont [11/16] 0.0, 128
        %436 = vxpose.xlu0.b32.cont [12/16] 0.0, 128
        %437 = vxpose.xlu0.b32.cont [13/16] 0.0, 128
        %438 = vxpose.xlu0.b32.cont [14/16] 0.0, 128
        %439 = vxpose.xlu0.b32.cont [15/16] 0.0, 128
        %440 = vxpose.xlu0.b32.end [16/16] 0.0, 128
        %v441 = vpop.trf.xlu0
        %v442 = vpop.trf.xlu0
        %v443 = vpop.trf.xlu0
        %v444 = vpop.trf.xlu0
        %v445 = vpop.trf.xlu0
        %v446 = vpop.trf.xlu0
        %v447 = vpop.trf.xlu0
        %v448 = vpop.trf.xlu0
        %v449 = vpop.trf.xlu0
        %v450 = vpop.trf.xlu0
        %v451 = vpop.trf.xlu0
        %v452 = vpop.trf.xlu0
        %v453 = vpop.trf.xlu0
        %v454 = vpop.trf.xlu0
        %v455 = vpop.trf.xlu0
        %v456 = vpop.trf.xlu0
        %457 = vxpose.xlu0.b32.start [1/16] %v353, 128
        %458 = vxpose.xlu0.b32.cont [2/16] %v358, 128
        %459 = vxpose.xlu0.b32.cont [3/16] 0.0, 128
        %460 = vxpose.xlu0.b32.cont [4/16] 0.0, 128
        %461 = vxpose.xlu0.b32.cont [5/16] 0.0, 128
        %462 = vxpose.xlu0.b32.cont [6/16] 0.0, 128
        %463 = vxpose.xlu0.b32.cont [7/16] 0.0, 128
        %464 = vxpose.xlu0.b32.cont [8/16] 0.0, 128
        %465 = vxpose.xlu0.b32.cont [9/16] 0.0, 128
        %466 = vxpose.xlu0.b32.cont [10/16] 0.0, 128
        %467 = vxpose.xlu0.b32.cont [11/16] 0.0, 128
        %468 = vxpose.xlu0.b32.cont [12/16] 0.0, 128
        %469 = vxpose.xlu0.b32.cont [13/16] 0.0, 128
        %470 = vxpose.xlu0.b32.cont [14/16] 0.0, 128
        %471 = vxpose.xlu0.b32.cont [15/16] 0.0, 128
        %472 = vxpose.xlu0.b32.end [16/16] 0.0, 128
        %v473 = vpop.trf.xlu0
        %v474 = vpop.trf.xlu0
        %v475 = vpop.trf.xlu0
        %v476 = vpop.trf.xlu0
        %v477 = vpop.trf.xlu0
        %v478 = vpop.trf.xlu0
        %v479 = vpop.trf.xlu0
        %v480 = vpop.trf.xlu0
        %v481 = vpop.trf.xlu0
        %v482 = vpop.trf.xlu0
        %v483 = vpop.trf.xlu0
        %v484 = vpop.trf.xlu0
        %v485 = vpop.trf.xlu0
        %v486 = vpop.trf.xlu0
        %v487 = vpop.trf.xlu0
        %v488 = vpop.trf.xlu0
        %v490 = vsel %vm231, %v377, 0
        %v493 = vsel %vm231, %v378, 0
        %v496 = vsel %vm231, %v409, 0
        %v499 = vsel %vm231, %v410, 0
        %v502 = vsel %vm231, %v441, 0
        %v505 = vsel %vm231, %v442, 0
        %v508 = vsel %vm231, %v473, 0
        %v511 = vsel %vm231, %v474, 0
        %513 = vmatprep.subr.mxu0 0.0
        %514 = vmatpush1.msra.mxu0 %v221
        %515 = vmatprep.subr.mxu0 0.0
        %516 = vmatpush1.msra.mxu0 %v222
        %517 = vmatprep.subr.mxu0 0.0
        %518 = vmatpush1.msra.mxu0 0.0
        %519 = vmatprep.subr.mxu0 0.0
        %520 = vmatpush1.msra.mxu0 0.0
        %521 = vmatprep.subr.mxu0 0.0
        %522 = vmatpush1.msra.mxu0 0.0
        %523 = vmatprep.subr.mxu0 0.0
        %524 = vmatpush1.msra.mxu0 0.0
        %525 = vmatprep.subr.mxu0 0.0
        %526 = vmatpush1.msra.mxu0 0.0
        %527 = vmatprep.subr.mxu0 0.0
        %528 = vmatpush1.msra.mxu0 0.0
        %529 = vmatprep.subr.mxu0 0.0
        %530 = vmatpush1.msra.mxu0 0.0
        %531 = vmatprep.subr.mxu0 0.0
        %532 = vmatpush1.msra.mxu0 0.0
        %533 = vmatprep.subr.mxu0 0.0
        %534 = vmatpush1.msra.mxu0 0.0
        %535 = vmatprep.subr.mxu0 0.0
        %536 = vmatpush1.msra.mxu0 0.0
        %537 = vmatprep.subr.mxu0 0.0
        %538 = vmatpush1.msra.mxu0 0.0
        %539 = vmatprep.subr.mxu0 0.0
        %540 = vmatpush1.msra.mxu0 0.0
        %541 = vmatprep.subr.mxu0 0.0
        %542 = vmatpush1.msra.mxu0 0.0
        %543 = vmatprep.subr.mxu0 0.0
        %544 = vmatpush1.msra.mxu0 0.0
        %545 = vmatprep.subr.mxu0 0.0
        %546 = vmatpush1.msra.mxu0 0.0
        %547 = vmatprep.subr.mxu0 0.0
        %548 = vmatpush1.msra.mxu0 0.0
        %549 = vmatprep.subr.mxu0 0.0
        %550 = vmatpush1.msra.mxu0 0.0
        %551 = vmatprep.subr.mxu0 0.0
        %552 = vmatpush1.msra.mxu0 0.0
        %553 = vmatprep.subr.mxu0 0.0
        %554 = vmatpush1.msra.mxu0 0.0
        %555 = vmatprep.subr.mxu0 0.0
        %556 = vmatpush1.msra.mxu0 0.0
        %557 = vmatprep.subr.mxu0 0.0
        %558 = vmatpush1.msra.mxu0 0.0
        %559 = vmatprep.subr.mxu0 0.0
        %560 = vmatpush1.msra.mxu0 0.0
        %561 = vmatprep.subr.mxu0 0.0
        %562 = vmatpush1.msra.mxu0 0.0
        %563 = vmatprep.subr.mxu0 0.0
        %564 = vmatpush1.msra.mxu0 0.0
        %565 = vmatprep.subr.mxu0 0.0
        %566 = vmatpush1.msra.mxu0 0.0
        %567 = vmatprep.subr.mxu0 0.0
        %568 = vmatpush1.msra.mxu0 0.0
        %569 = vmatprep.subr.mxu0 0.0
        %570 = vmatpush1.msra.mxu0 0.0
        %571 = vmatprep.subr.mxu0 0.0
        %572 = vmatpush1.msra.mxu0 0.0
        %573 = vmatprep.subr.mxu0 0.0
        %574 = vmatpush1.msra.mxu0 0.0
        %575 = vmatprep.subr.mxu0 0.0
        %576 = vmatpush1.msra.mxu0 0.0
        %577 = vmatprep.mubr.f32.mxu0 0.0
        %578 = vmatmul.mubr.f32.gmra.mrb[0].mxu0 %v490
        %v579 = vpop.f32.mrb[0].mxu0
        %v580 = vadd.f32 0.0, %v579
        %v581 = vpop.f32.mrb[0].mxu0
        %582 = vmatprep.mubr.f32.mxu0 0.0
        %583 = vmatmul.mubr.f32.gmra.mrb[0].mxu0 %v493
        %v584 = vpop.f32.mrb[0].mxu0
        %v585 = vadd.f32 0.0, %v584
        %v586 = vpop.f32.mrb[0].mxu0
        %587 = vmatprep.mubr.f32.mxu0 0.0
        %588 = vmatmul.mubr.f32.gmra.mrb[0].mxu0 %v496
        %v589 = vpop.f32.mrb[0].mxu0
        %v590 = vadd.f32 0.0, %v589
        %v591 = vpop.f32.mrb[0].mxu0
        %592 = vmatprep.mubr.f32.mxu0 0.0
        %593 = vmatmul.mubr.f32.gmra.mrb[0].mxu0 %v499
        %v594 = vpop.f32.mrb[0].mxu0
        %v595 = vadd.f32 0.0, %v594
        %v596 = vpop.f32.mrb[0].mxu0
        %597 = vmatprep.mubr.f32.mxu0 0.0
        %598 = vmatmul.mubr.f32.gmra.mrb[0].mxu0 %v502
        %v599 = vpop.f32.mrb[0].mxu0
        %v600 = vadd.f32 0.0, %v599
        %v601 = vpop.f32.mrb[0].mxu0
        %602 = vmatprep.mubr.f32.mxu0 0.0
        %603 = vmatmul.mubr.f32.gmra.mrb[0].mxu0 %v505
        %v604 = vpop.f32.mrb[0].mxu0
        %v605 = vadd.f32 0.0, %v604
        %v606 = vpop.f32.mrb[0].mxu0
        %607 = vmatprep.mubr.f32.mxu0 0.0
        %608 = vmatmul.mubr.f32.gmra.mrb[0].mxu0 %v508
        %v609 = vpop.f32.mrb[0].mxu0
        %v610 = vadd.f32 0.0, %v609
        %v611 = vpop.f32.mrb[0].mxu0
        %612 = vmatprep.mubr.f32.mxu0 0.0
        %613 = vmatmul.mubr.f32.gmra.mrb[0].mxu0 %v511
        %v614 = vpop.f32.mrb[0].mxu0
        %v615 = vadd.f32 0.0, %v614
        %v616 = vpop.f32.mrb[0].mxu0
        %617 = vdwg.mxu0
        %618 = vxpose.xlu0.b32.start [1/16] %v580, 128
        %619 = vxpose.xlu0.b32.cont [2/16] %v585, 128
        %620 = vxpose.xlu0.b32.cont [3/16] 0.0, 128
        %621 = vxpose.xlu0.b32.cont [4/16] 0.0, 128
        %622 = vxpose.xlu0.b32.cont [5/16] 0.0, 128
        %623 = vxpose.xlu0.b32.cont [6/16] 0.0, 128
        %624 = vxpose.xlu0.b32.cont [7/16] 0.0, 128
        %625 = vxpose.xlu0.b32.cont [8/16] 0.0, 128
        %626 = vxpose.xlu0.b32.cont [9/16] 0.0, 128
        %627 = vxpose.xlu0.b32.cont [10/16] 0.0, 128
        %628 = vxpose.xlu0.b32.cont [11/16] 0.0, 128
        %629 = vxpose.xlu0.b32.cont [12/16] 0.0, 128
        %630 = vxpose.xlu0.b32.cont [13/16] 0.0, 128
        %631 = vxpose.xlu0.b32.cont [14/16] 0.0, 128
        %632 = vxpose.xlu0.b32.cont [15/16] 0.0, 128
        %633 = vxpose.xlu0.b32.end [16/16] 0.0, 128
        %v634 = vpop.trf.xlu0
        %v635 = vpop.trf.xlu0
        %v636 = vpop.trf.xlu0
        %v637 = vpop.trf.xlu0
        %v638 = vpop.trf.xlu0
        %v639 = vpop.trf.xlu0
        %v640 = vpop.trf.xlu0
        %v641 = vpop.trf.xlu0
        %v642 = vpop.trf.xlu0
        %v643 = vpop.trf.xlu0
        %v644 = vpop.trf.xlu0
        %v645 = vpop.trf.xlu0
        %v646 = vpop.trf.xlu0
        %v647 = vpop.trf.xlu0
        %v648 = vpop.trf.xlu0
        %v649 = vpop.trf.xlu0
        %650 = vxpose.xlu0.b32.start [1/16] %v590, 128
        %651 = vxpose.xlu0.b32.cont [2/16] %v595, 128
        %652 = vxpose.xlu0.b32.cont [3/16] 0.0, 128
        %653 = vxpose.xlu0.b32.cont [4/16] 0.0, 128
        %654 = vxpose.xlu0.b32.cont [5/16] 0.0, 128
        %655 = vxpose.xlu0.b32.cont [6/16] 0.0, 128
        %656 = vxpose.xlu0.b32.cont [7/16] 0.0, 128
        %657 = vxpose.xlu0.b32.cont [8/16] 0.0, 128
        %658 = vxpose.xlu0.b32.cont [9/16] 0.0, 128
        %659 = vxpose.xlu0.b32.cont [10/16] 0.0, 128
        %660 = vxpose.xlu0.b32.cont [11/16] 0.0, 128
        %661 = vxpose.xlu0.b32.cont [12/16] 0.0, 128
        %662 = vxpose.xlu0.b32.cont [13/16] 0.0, 128
        %663 = vxpose.xlu0.b32.cont [14/16] 0.0, 128
        %664 = vxpose.xlu0.b32.cont [15/16] 0.0, 128
        %665 = vxpose.xlu0.b32.end [16/16] 0.0, 128
        %v666 = vpop.trf.xlu0
        %v667 = vpop.trf.xlu0
        %v668 = vpop.trf.xlu0
        %v669 = vpop.trf.xlu0
        %v670 = vpop.trf.xlu0
        %v671 = vpop.trf.xlu0
        %v672 = vpop.trf.xlu0
        %v673 = vpop.trf.xlu0
        %v674 = vpop.trf.xlu0
        %v675 = vpop.trf.xlu0
        %v676 = vpop.trf.xlu0
        %v677 = vpop.trf.xlu0
        %v678 = vpop.trf.xlu0
        %v679 = vpop.trf.xlu0
        %v680 = vpop.trf.xlu0
        %v681 = vpop.trf.xlu0
        %682 = vxpose.xlu0.b32.start [1/16] %v600, 128
        %683 = vxpose.xlu0.b32.cont [2/16] %v605, 128
        %684 = vxpose.xlu0.b32.cont [3/16] 0.0, 128
        %685 = vxpose.xlu0.b32.cont [4/16] 0.0, 128
        %686 = vxpose.xlu0.b32.cont [5/16] 0.0, 128
        %687 = vxpose.xlu0.b32.cont [6/16] 0.0, 128
        %688 = vxpose.xlu0.b32.cont [7/16] 0.0, 128
        %689 = vxpose.xlu0.b32.cont [8/16] 0.0, 128
        %690 = vxpose.xlu0.b32.cont [9/16] 0.0, 128
        %691 = vxpose.xlu0.b32.cont [10/16] 0.0, 128
        %692 = vxpose.xlu0.b32.cont [11/16] 0.0, 128
        %693 = vxpose.xlu0.b32.cont [12/16] 0.0, 128
        %694 = vxpose.xlu0.b32.cont [13/16] 0.0, 128
        %695 = vxpose.xlu0.b32.cont [14/16] 0.0, 128
        %696 = vxpose.xlu0.b32.cont [15/16] 0.0, 128
        %697 = vxpose.xlu0.b32.end [16/16] 0.0, 128
        %v698 = vpop.trf.xlu0
        %v699 = vpop.trf.xlu0
        %v700 = vpop.trf.xlu0
        %v701 = vpop.trf.xlu0
        %v702 = vpop.trf.xlu0
        %v703 = vpop.trf.xlu0
        %v704 = vpop.trf.xlu0
        %v705 = vpop.trf.xlu0
        %v706 = vpop.trf.xlu0
        %v707 = vpop.trf.xlu0
        %v708 = vpop.trf.xlu0
        %v709 = vpop.trf.xlu0
        %v710 = vpop.trf.xlu0
        %v711 = vpop.trf.xlu0
        %v712 = vpop.trf.xlu0
        %v713 = vpop.trf.xlu0
        %714 = vxpose.xlu0.b32.start [1/16] %v610, 128
        %715 = vxpose.xlu0.b32.cont [2/16] %v615, 128
        %716 = vxpose.xlu0.b32.cont [3/16] 0.0, 128
        %717 = vxpose.xlu0.b32.cont [4/16] 0.0, 128
        %718 = vxpose.xlu0.b32.cont [5/16] 0.0, 128
        %719 = vxpose.xlu0.b32.cont [6/16] 0.0, 128
        %720 = vxpose.xlu0.b32.cont [7/16] 0.0, 128
        %721 = vxpose.xlu0.b32.cont [8/16] 0.0, 128
        %722 = vxpose.xlu0.b32.cont [9/16] 0.0, 128
        %723 = vxpose.xlu0.b32.cont [10/16] 0.0, 128
        %724 = vxpose.xlu0.b32.cont [11/16] 0.0, 128
        %725 = vxpose.xlu0.b32.cont [12/16] 0.0, 128
        %726 = vxpose.xlu0.b32.cont [13/16] 0.0, 128
        %727 = vxpose.xlu0.b32.cont [14/16] 0.0, 128
        %728 = vxpose.xlu0.b32.cont [15/16] 0.0, 128
        %729 = vxpose.xlu0.b32.end [16/16] 0.0, 128
        %v730 = vpop.trf.xlu0
        %v731 = vpop.trf.xlu0
        %v732 = vpop.trf.xlu0
        %v733 = vpop.trf.xlu0
        %v734 = vpop.trf.xlu0
        %v735 = vpop.trf.xlu0
        %v736 = vpop.trf.xlu0
        %v737 = vpop.trf.xlu0
        %v738 = vpop.trf.xlu0
        %v739 = vpop.trf.xlu0
        %v740 = vpop.trf.xlu0
        %v741 = vpop.trf.xlu0
        %v742 = vpop.trf.xlu0
        %v743 = vpop.trf.xlu0
        %v744 = vpop.trf.xlu0
        %v745 = vpop.trf.xlu0
        %746 = vst.msk [vmem:[%s216] sm:$0xff] %vm231, %v634
        %747 = vst.msk [vmem:[%s216 + $0x8] sm:$0xff] %vm231, %v635
        %748 = vst.msk [vmem:[%s216 + $0x10] sm:$0xff] %vm231, %v666
        %749 = vst.msk [vmem:[%s216 + $0x18] sm:$0xff] %vm231, %v667
        %750 = vst.msk [vmem:[%s216 + $0x20] sm:$0xff] %vm231, %v698
        %751 = vst.msk [vmem:[%s216 + $0x28] sm:$0xff] %vm231, %v699
        %752 = vst.msk [vmem:[%s216 + $0x30] sm:$0xff] %vm231, %v730
        %753 = vst.msk [vmem:[%s216 + $0x38] sm:$0xff] %vm231, %v731
        %s754 = sand.u32 %s95, 1
        %s755 = scalar_lea.sflag [#allocation4], %s754
        %s756 = sand.u32 %s95, 1
        %s757 = smul.addr %s756, 64
        %s758 = scalar_lea.vmem [#allocation8], %s757
        // Predicated region
        $region45: #{tpu_custom_call.1} parent=31 // pred_check
          %p759 = pneg %p105
        $region46: #{tpu_custom_call.1} parent=31 // pred_check_branch
          %761 = sbr.rel (%p759) target = $region48
        $region47: #{tpu_custom_call.1} parent=31 // pred_region
          %s762 = smul.u32 4, %s19
          %s764 = ssub.s32 1024, 1024
          %765 = vsyncadd %s755, %s764
          %s766 = smul.addr %s762, 2
          %s767 = smul.addr %s766, 128
          %s768 = scalar_lea.hbm %s3, %s767
          %s769 = sshll.u32 %s758, 4
          %s770 = int_to_ptr.vmem [resolvable:$true] %s769
          %775 = dma.vmem_to_hbm [thread:$0]  %s770, 1024, %s768, %s755, 128, 128, 8
        $region48: #{tpu_custom_call.1} parent=31 // pred_fallthru
          _
      $region32: #{tpu_custom_call.1} parent=5 // pred_fallthru
        _
      %p776 = scmp.le.s32.totalorder 2, %s14
      // Predicated region
      $region49: #{tpu_custom_call.1} parent=5 // pred_check
        %p777 = pneg %p776
      $region50: #{tpu_custom_call.1} parent=5 // pred_check_branch
        %779 = sbr.rel (%p777) target = $region52
      $region51: #{tpu_custom_call.1} parent=5 // pred_region
        %s780 = ssub.s32 %s14, 2
        // Predicated region
        $region53: #{tpu_custom_call.1} parent=51 // pred_check
          %p781 = pneg %p111
        $region54: #{tpu_custom_call.1} parent=51 // pred_check_branch
          %783 = sbr.rel (%p781) target = $region56
        $region55: #{tpu_custom_call.1} parent=51 // pred_region
          %s784 = sand.u32 %s96, 1
          %s785 = scalar_lea.sflag [#allocation4], %s784
          %s786 = sand.u32 %s96, 1
          %s787 = smul.addr %s786, 64
          %s788 = scalar_lea.vmem [#allocation8], %s787
          %789 = dma.done %s785, 1024
        $region56: #{tpu_custom_call.1} parent=51 // pred_fallthru
          _
      $region52: #{tpu_custom_call.1} parent=5 // pred_fallthru
        _
    $region6: #{tpu_custom_call.1} parent=1 // loop_footer
      %s18 = sadd.s32 1, %s14
    $region7: #{tpu_custom_call.1} parent=1 // loop_footer_branch
      %13 = sbr.rel target = $region3
    $region8: #{tpu_custom_call.1} parent=1 // loop_exit
      _
    %790 = vsyncpa [#allocation3], 1
    %s791 = scalar_lea.sflag [#allocation3], 1
    %792 = vsyncpa %s791, 1
    %793 = vsyncpa [#allocation6], 1
    %794 = vsyncpa [#allocation4], 1
    %s795 = scalar_lea.sflag [#allocation4], 1
    %796 = vsyncpa %s795, 1

</llo_original>
